<compile_context>
chip_gen: v5e
topology: v5e:2x2
jax: 0.10.0
libtpu: 0.0.40
codegen_flags: <defaults>
</compile_context>

<pallas_src>
import functools
import math

import jax
import jax.numpy as jnp
from jax.experimental import pallas as pl
from jax.experimental.pallas import tpu as pltpu


def _round_up(a, b):
    return ((a + b - 1) // b) * b


def _tile_sizes(N, tn, tk):
    """Clamp requested tiles for small problems; keep sublane/lane alignment."""
    tn = max(16, min(tn, _round_up(N, 16)))      # row tile (sublane axis)
    tk = max(128, min(tk, _round_up(N, 128)))    # contraction tile (lane axis)
    return tn, tk


def prepare_adj(adj, *, tn=512, tk=1024, matmul_dtype=jnp.bfloat16):
    """Pad + cast the (N, N) adjacency ONCE, outside the per-layer call.

    AdaGNN applies many AdagnnWith layers to the same adjacency; doing the
    pad/cast here avoids an extra full read+write pass over the N^2 tensor on
    every layer call of this HBM-bound kernel.  On v5e/v6e an int8 adj (for
    binary / tightly-quantized adjacencies) halves bytes again; on v7x use
    fp8 (e4m3) instead of int8 if sub-bf16 is desired.
    """
    N = adj.shape[0]
    tn, tk = _tile_sizes(N, tn, tk)
    ni, nk = _round_up(N, tn), _round_up(N, tk)
    adj_p = adj
    if adj.shape != (ni, nk):
        adj_p = jnp.pad(adj, ((0, ni - N), (0, nk - N)))
    return adj_p.astype(matmul_dtype)


def _make_kernel(resident_x, tk, finalize_dtype):
    def kernel(adj_ref, xk_ref, xi_ref, diag_ref, w_ref, b_ref,
               out_ref, e1_acc_ref):
        # adj_ref : (tn, tk)            tile of (padded, possibly bf16) adjacency
        # xk_ref  : (nk, F_in) resident OR (tk, F_in) streamed contraction x
        # xi_ref  : (tn, F_in)          row tile of x for the (x - e2) term
        # diag_ref: (1, F_in)           learnable diagonal
        # w_ref   : (F_in, F_out_p)     weight (F_out padded to lane width)
        # b_ref   : (1, F_out_p)        bias
        # out_ref : (tn, F_out_p)
        # e1_acc  : (tn, F_in) f32      VMEM accumulator, resident across K
        k = pl.program_id(1)

        if resident_x:
            # x lives fully in VMEM (DMA'd from HBM once); slice the K window.
            x_blk = xk_ref[pl.ds(pl.multiple_of(k * tk, tk), tk), :]
        else:
            x_blk = xk_ref[...]

        part = jnp.dot(adj_ref[...], x_blk, preferred_element_type=jnp.float32)

        @pl.when(k == 0)
        def _first():
            e1_acc_ref[...] = part           # direct write: no zero-init + RMW

        @pl.when(k != 0)
        def _accum():
            e1_acc_ref[...] += part

        @pl.when(k == pl.num_programs(1) - 1)
        def _finalize():
            # e2 = e1 @ (diag(d) + I) == e1 * (d + 1)   (VPU per-column scale)
            scale = diag_ref[...].astype(jnp.float32) + 1.0        # (1, F_in)
            e2 = e1_acc_ref[...] * scale                           # (tn, F_in)
            e4 = xi_ref[...].astype(jnp.float32) - e2              # (tn, F_in)
            if finalize_dtype is not None:                         # v5e knob
                e5 = jnp.dot(e4.astype(finalize_dtype),
                             w_ref[...].astype(finalize_dtype),
                             preferred_element_type=jnp.float32)
            else:
                e5 = jnp.dot(e4, w_ref[...].astype(jnp.float32),
                             preferred_element_type=jnp.float32)
            out_ref[...] = (e5 + b_ref[...].astype(jnp.float32)
                            ).astype(out_ref.dtype)
    return kernel


def adagnn_with(x, adj, weight, learnable_diag_1, bias, *,
                tn=512, tk=1024, matmul_dtype=jnp.bfloat16,
                finalize_dtype=None, x_vmem_budget_bytes=20 * 2**20):
    """Forward pass of AdagnnWith.

    `adj` may be the raw (N, N) adjacency, or the result of prepare_adj()
    (preferred when stacking layers: the pad/cast then happens once).
    `matmul_dtype` controls the adj / x contraction stream dtype (bf16 default;
    f32 for exact numerics; int8 on v5e/v6e or fp8 on v7x where tolerable).
    `finalize_dtype=jnp.bfloat16` additionally runs the (x - e2) @ W matmul in
    bf16 (mainly useful on v5e).
    """
    N, F_in = x.shape
    assert weight.shape[0] == F_in
    F_out = weight.shape[1]
    if bias is None:
        bias = jnp.zeros((F_out,), dtype=x.dtype)

    tn, tk = _tile_sizes(N, tn, tk)
    ni, nk = _round_up(N, tn)     , _round_up(N, tk)
    f_out_p = _round_up(F_out, 128)            # lane-dense output stores

    # ---- adjacency: use a pre-prepared (padded + cast) adj untouched;
    #      otherwise fall back to the one-off convenience pad/cast here.
    if adj.shape == (ni, nk) and adj.dtype == jnp.dtype(matmul_dtype):
        adj_p = adj
    else:
        assert adj.shape == (N, N), "adj must be (N, N) or prepare_adj() output"
        adj_p = prepare_adj(adj, tn=tn, tk=tk, matmul_dtype=matmul_dtype)

    # ---- per-layer tensors (x changes every layer; cannot be hoisted)
    x_rows = x if ni == N else jnp.pad(x, ((0, ni - N), (0, 0)))
    x_k = x if nk == N else jnp.pad(x, ((0, nk - N), (0, 0)))
    x_k = x_k.astype(matmul_dtype)
    w_p = weight if f_out_p == F_out else jnp.pad(
        weight, ((0, 0), (0, f_out_p - F_out)))
    b_p = jnp.pad(bias.reshape(1, F_out), ((0, 0), (0, f_out_p - F_out)))
    diag_row = learnable_diag_1.reshape(1, F_in)

    # ---- resident-x decision (VMEM lane-padded, double-buffered footprint)
    f_in_lanes = _round_up(F_in, 128)
    xk_itemsize = jnp.dtype(matmul_dtype).itemsize
    x_resident_bytes = 2 * nk * f_in_lanes * xk_itemsize
    resident_x = x_resident_bytes <= x_vmem_budget_bytes

    grid = (ni // tn, nk // tk)
    if resident_x:
        xk_spec = pl.BlockSpec((nk, F_in), lambda i, k: (0, 0))
    else:
        xk_spec = pl.BlockSpec((tk, F_in), lambda i, k: (k, 0))

    # ---- VMEM budget estimate (lane-padded, double-buffered) -> scoped limit
    adj_itemsize = jnp.dtype(matmul_dtype).itemsize
    out_itemsize = jnp.dtype(x.dtype).itemsize
    vmem_est = (
        2 * tn * tk * adj_itemsize                                   # adj tiles
        + (x_resident_bytes if resident_x
           else 2 * tk * f_in_lanes * xk_itemsize)                   # x
        + 2 * tn * f_in_lanes * 4                                    # xi tiles
        + 2 * 8 * f_in_lanes * 4                                     # diag
        + 2 * _round_up(F_in, 8) * f_out_p * 4                       # weight
        + 2 * 8 * f_out_p * 4                                        # bias
        + 2 * tn * f_out_p * out_itemsize                            # out tiles
        + tn * f_in_lanes * 4)                                       # e1 acc
    # <=48 MiB keeps the same config valid on v7x (64 MiB/TC) and v5e/v6e.
    vmem_limit = int(min(48 * 2**20, max(32 * 2**20, 1.25 * vmem_est)))

    # ---- cost estimate reflecting real HBM traffic (x counted per row tile
    #      when streamed, once when resident)
    row_tiles = ni // tn
    x_stream_bytes = nk * F_in * xk_itemsize * (1 if resident_x else row_tiles)
    bytes_accessed = int(
        ni * nk * adj_itemsize
        + x_stream_bytes
        + ni * F_in * jnp.dtype(x.dtype).itemsize
        + F_in * f_out_p * jnp.dtype(weight.dtype).itemsize
        + ni * f_out_p * out_itemsize)
    flops = int(2 * ni * nk * F_in + 2 * ni * F_in * f_out_p)

    out_p = pl.pallas_call(
        _make_kernel(resident_x, tk, finalize_dtype),
        out_shape=jax.ShapeDtypeStruct((ni, f_out_p), x.dtype),
        grid_spec=pltpu.PrefetchScalarGridSpec(
            num_scalar_prefetch=0,
            grid=grid,
            in_specs=[
                pl.BlockSpec((tn, tk), lambda i, k: (i, k)),          # adj tile
                xk_spec,                                              # x (contraction)
                pl.BlockSpec((tn, F_in), lambda i, k: (i, 0)),        # x (row tile)
                pl.BlockSpec((1, F_in), lambda i, k: (0, 0)),         # diag
                pl.BlockSpec((F_in, f_out_p), lambda i, k: (0, 0)),   # weight
                pl.BlockSpec((1, f_out_p), lambda i, k: (0, 0)),      # bias
            ],
            out_specs=pl.BlockSpec((tn, f_out_p), lambda i, k: (i, 0)),
            scratch_shapes=[pltpu.VMEM((tn, F_in), jnp.float32)],     # e1 acc
        ),
        compiler_params=pltpu.CompilerParams(
            dimension_semantics=("parallel", "arbitrary"),
            vmem_limit_bytes=vmem_limit,
        ),
        cost_estimate=pl.CostEstimate(
            flops=flops, transcendentals=0, bytes_accessed=bytes_accessed),
    )(adj_p, x_k, x_rows, diag_row, w_p, b_p)

    return out_p[:N, :F_out]


def adagnn_with_ref(x, adj, weight, learnable_diag_1, bias,
                    matmul_dtype=jnp.bfloat16):
    if matmul_dtype is not None and jnp.dtype(matmul_dtype) != jnp.float32:
        adj_m = adj.astype(matmul_dtype).astype(jnp.float32)
        x_m = x.astype(matmul_dtype).astype(jnp.float32)
    else:
        adj_m, x_m = adj, x
    e1 = jnp.dot(adj_m, x_m, precision=jax.lax.Precision.HIGHEST)
    e2 = e1 * (learnable_diag_1 + 1.0)[None, :]
    e4 = x - e2
    return jnp.dot(e4, weight, precision=jax.lax.Precision.HIGHEST) + bias[None, :]


def _make_inputs(key, N, in_features, out_features):
    k_x, k_adj, k_w, k_d, k_b = jax.random.split(key, 5)
    x = jax.random.normal(k_x, (N, in_features), dtype=jnp.float32)
    adj = jax.random.uniform(k_adj, (N, N), dtype=jnp.float32)
    # Deterministic parameter init mirroring reset_parameters():
    stdv = 1.0 / math.sqrt(out_features)
    weight = jax.random.uniform(k_w, (in_features, out_features),
                                minval=-stdv, maxval=stdv, dtype=jnp.float32)
    learnable_diag_1 = 0.01 * jax.random.normal(
        k_d, (in_features,), dtype=jnp.float32)
    bias = jax.random.uniform(k_b, (out_features,),
                              minval=-stdv, maxval=stdv, dtype=jnp.float32)
    return x, adj, weight, learnable_diag_1, bias


if __name__ == "__main__":
    key = jax.random.PRNGKey(0)
    k1, k2 = jax.random.split(key)

    # --- test 1: small module shapes; exact f32 stream and default bf16 stream
    N, f_in, f_out = 16, 32, 16
    x, adj, w, d, b = _make_inputs(k1, N, f_in, f_out)

    out_f32 = jax.block_until_ready(
        adagnn_with(x, adj, w, d, b, matmul_dtype=jnp.float32))
    ref_f32 = adagnn_with_ref(x, adj, w, d, b, matmul_dtype=jnp.float32)
    assert out_f32.shape == (N, f_out)
    assert jnp.allclose(out_f32, ref_f32, atol=1e-4, rtol=1e-4)

    out_bf16 = jax.block_until_ready(adagnn_with(x, adj, w, d, b))
    ref_bf16 = adagnn_with_ref(x, adj, w, d, b)
    assert jnp.allclose(out_bf16, ref_bf16, atol=2e-3, rtol=2e-3)

    # --- test 2: ragged N, multi-tile K accumulation, hoisted prepare_adj path
    N2, f_in2, f_out2 = 300, 64, 48
    x2, adj2, w2, d2, b2 = _make_inputs(k2, N2, f_in2, f_out2)
    tn2, tk2 = 128, 128
    adj2_prep = prepare_adj(adj2, tn=tn2, tk=tk2, matmul_dtype=jnp.bfloat16)
    layer = functools.partial(adagnn_with, tn=tn2, tk=tk2,
                              matmul_dtype=jnp.bfloat16)
    out2a = jax.block_until_ready(layer(x2, adj2_prep, w2, d2, b2))  # hoisted
    out2b = jax.block_until_ready(layer(x2, adj2, w2, d2, b2))       # raw adj
    ref2 = adagnn_with_ref(x2, adj2, w2, d2, b2, matmul_dtype=jnp.bfloat16)
    assert out2a.shape == (N2, f_out2)
    assert jnp.allclose(out2a, ref2, atol=5e-3, rtol=5e-3)
    assert jnp.allclose(out2a, out2b, atol=1e-6, rtol=1e-6)

    print("KERNEL_OK")
</pallas_src>

<mosaic_0001>
module attributes {stable_mosaic.version = 11 : i64} {
  func.func @kernel(%arg0: i32, %arg1: i32, %arg2: memref<16x128xf32, #tpu.memory_space<vmem>>, %arg3: memref<128x32xf32, #tpu.memory_space<vmem>>, %arg4: memref<16x32xf32, #tpu.memory_space<vmem>>, %arg5: memref<1x32xf32, #tpu.memory_space<vmem>>, %arg6: memref<32x128xf32, #tpu.memory_space<vmem>>, %arg7: memref<1x128xf32, #tpu.memory_space<vmem>>, %arg8: memref<16x128xf32, #tpu.memory_space<vmem>>, %arg9: memref<16x32xf32, #tpu.memory_space<vmem>>) attributes {dimension_semantics = [#tpu.dimension_semantics<parallel>, #tpu.dimension_semantics<arbitrary>], iteration_bounds = array<i64: 1, 1>, scalar_prefetch = 0 : i64, scratch_operands = 1 : i64, tpu.core_type = #tpu.core_type<tc>, window_params = [{transform_indices = @transform_0, window_bounds = array<i64: 16, 128>}, {pipeline_mode = #tpu.pipeline_mode<synchronous>, transform_indices = @transform_1, window_bounds = array<i64: 128, 32>}, {transform_indices = @transform_2, window_bounds = array<i64: 16, 32>}, {pipeline_mode = #tpu.pipeline_mode<synchronous>, transform_indices = @transform_3, window_bounds = array<i64: 1, 32>}, {pipeline_mode = #tpu.pipeline_mode<synchronous>, transform_indices = @transform_4, window_bounds = array<i64: 32, 128>}, {pipeline_mode = #tpu.pipeline_mode<synchronous>, transform_indices = @transform_5, window_bounds = array<i64: 1, 128>}, {transform_indices = @transform_6, window_bounds = array<i64: 16, 128>}]} {
    %c128_i32 = arith.constant 128 : i32
    %0 = arith.muli %arg1, %c128_i32 : i32
    %1 = tpu.assume_multiple %0, 128 : i32
    %2 = arith.index_cast %1 : i32 to index
    %c0 = arith.constant 0 : index
    %3 = vector.load %arg3[%2, %c0] : memref<128x32xf32, #tpu.memory_space<vmem>>, vector<128x32xf32>
    %c0_0 = arith.constant 0 : index
    %c0_1 = arith.constant 0 : index
    %4 = vector.load %arg2[%c0_0, %c0_1] : memref<16x128xf32, #tpu.memory_space<vmem>>, vector<16x128xf32>
    %cst = arith.constant dense<0.000000e+00> : vector<16x32xf32>
    %5 = tpu.matmul %4, %3, %cst {dimension_numbers = #tpu.dot_dimension_numbers<[1], [0], [0], [1], [0, 0, 1, 1], [], []>} : vector<16x128xf32>, vector<128x32xf32>, vector<16x32xf32> -> vector<16x32xf32>
    %c0_i32 = arith.constant 0 : i32
    %6 = arith.cmpi eq, %arg1, %c0_i32 : i32
    %7 = arith.extui %6 : i1 to i32
    %c0_i32_2 = arith.constant 0 : i32
    %8 = arith.cmpi ne, %7, %c0_i32_2 : i32
    scf.if %8 {
      %c0_7 = arith.constant 0 : index
      %c0_8 = arith.constant 0 : index
      %15 = vector.load %arg9[%c0_7, %c0_8] : memref<16x32xf32, #tpu.memory_space<vmem>>, vector<16x32xf32>
      tpu.vector_store %arg9[%c0_7, %c0_8], %5 {strides = array<i32>} : memref<16x32xf32, #tpu.memory_space<vmem>>, vector<16x32xf32>,
    } else {
    }
    %c0_i32_3 = arith.constant 0 : i32
    %9 = arith.cmpi ne, %arg1, %c0_i32_3 : i32
    %10 = arith.extui %9 : i1 to i32
    %c0_i32_4 = arith.constant 0 : i32
    %11 = arith.cmpi ne, %10, %c0_i32_4 : i32
    scf.if %11 {
      %c0_7 = arith.constant 0 : index
      %c0_8 = arith.constant 0 : index
      %15 = vector.load %arg9[%c0_7, %c0_8] : memref<16x32xf32, #tpu.memory_space<vmem>>, vector<16x32xf32>
      %16 = arith.addf %15, %5 : vector<16x32xf32>
      %c0_9 = arith.constant 0 : index
      %c0_10 = arith.constant 0 : index
      %17 = vector.load %arg9[%c0_9, %c0_10] : memref<16x32xf32, #tpu.memory_space<vmem>>, vector<16x32xf32>
      tpu.vector_store %arg9[%c0_9, %c0_10], %16 {strides = array<i32>} : memref<16x32xf32, #tpu.memory_space<vmem>>, vector<16x32xf32>,
    } else {
    }
    %c0_i32_5 = arith.constant 0 : i32
    %12 = arith.cmpi eq, %arg1, %c0_i32_5 : i32
    %13 = arith.extui %12 : i1 to i32
    %c0_i32_6 = arith.constant 0 : i32
    %14 = arith.cmpi ne, %13, %c0_i32_6 : i32
    scf.if %14 {
      %c0_7 = arith.constant 0 : index
      %c0_8 = arith.constant 0 : index
      %15 = vector.load %arg5[%c0_7, %c0_8] : memref<1x32xf32, #tpu.memory_space<vmem>>, vector<1x32xf32>
      %cst_9 = arith.constant 1.000000e+00 : f32
      %16 = vector.broadcast %cst_9 : f32 to vector<1x32xf32>
      %17 = arith.addf %15, %16 : vector<1x32xf32>
      %c0_10 = arith.constant 0 : index
      %c0_11 = arith.constant 0 : index
      %18 = vector.load %arg9[%c0_10, %c0_11] : memref<16x32xf32, #tpu.memory_space<vmem>>, vector<16x32xf32>
      %19 = vector.broadcast %17 : vector<1x32xf32> to vector<16x32xf32>
      %20 = arith.mulf %18, %19 : vector<16x32xf32>
      %c0_12 = arith.constant 0 : index
      %c0_13 = arith.constant 0 : index
      %21 = vector.load %arg4[%c0_12, %c0_13] : memref<16x32xf32, #tpu.memory_space<vmem>>, vector<16x32xf32>
      %22 = arith.subf %21, %20 : vector<16x32xf32>
      %c0_14 = arith.constant 0 : index
      %c0_15 = arith.constant 0 : index
      %23 = vector.load %arg6[%c0_14, %c0_15] : memref<32x128xf32, #tpu.memory_space<vmem>>, vector<32x128xf32>
      %cst_16 = arith.constant dense<0.000000e+00> : vector<16x128xf32>
      %24 = tpu.matmul %22, %23, %cst_16 {dimension_numbers = #tpu.dot_dimension_numbers<[1], [0], [0], [1], [0, 0, 1, 1], [], []>} : vector<16x32xf32>, vector<32x128xf32>, vector<16x128xf32> -> vector<16x128xf32>
      %c0_17 = arith.constant 0 : index
      %c0_18 = arith.constant 0 : index
      %25 = vector.load %arg7[%c0_17, %c0_18] : memref<1x128xf32, #tpu.memory_space<vmem>>, vector<1x128xf32>
      %26 = vector.broadcast %25 : vector<1x128xf32> to vector<16x128xf32>
      %27 = arith.addf %24, %26 : vector<16x128xf32>
      %c0_19 = arith.constant 0 : index
      %c0_20 = arith.constant 0 : index
      %28 = vector.load %arg8[%c0_19, %c0_20] : memref<16x128xf32, #tpu.memory_space<vmem>>, vector<16x128xf32>
      tpu.vector_store %arg8[%c0_19, %c0_20], %27 {strides = array<i32>} : memref<16x128xf32, #tpu.memory_space<vmem>>, vector<16x128xf32>,
    } else {
    }
    return
  }
  func.func @transform_0(%arg0: i32, %arg1: i32) -> (i32, i32) {
    %c0_i32 = arith.constant 0 : i32
    return %arg0, %arg1 : i32, i32
  }
  func.func @transform_1(%arg0: i32, %arg1: i32) -> (i32, i32) {
    %c0_i32 = arith.constant 0 : i32
    %c0_i32_0 = arith.constant 0 : i32
    %c0_i32_1 = arith.constant 0 : i32
    return %c0_i32, %c0_i32_0 : i32, i32
  }
  func.func @transform_2(%arg0: i32, %arg1: i32) -> (i32, i32) {
    %c0_i32 = arith.constant 0 : i32
    %c0_i32_0 = arith.constant 0 : i32
    return %arg0, %c0_i32 : i32, i32
  }
  func.func @transform_3(%arg0: i32, %arg1: i32) -> (i32, i32) {
    %c0_i32 = arith.constant 0 : i32
    %c0_i32_0 = arith.constant 0 : i32
    %c0_i32_1 = arith.constant 0 : i32
    return %c0_i32, %c0_i32_0 : i32, i32
  }
  func.func @transform_4(%arg0: i32, %arg1: i32) -> (i32, i32) {
    %c0_i32 = arith.constant 0 : i32
    %c0_i32_0 = arith.constant 0 : i32
    %c0_i32_1 = arith.constant 0 : i32
    return %c0_i32, %c0_i32_0 : i32, i32
  }
  func.func @transform_5(%arg0: i32, %arg1: i32) -> (i32, i32) {
    %c0_i32 = arith.constant 0 : i32
    %c0_i32_0 = arith.constant 0 : i32
    %c0_i32_1 = arith.constant 0 : i32
    return %c0_i32, %c0_i32_0 : i32, i32
  }
  func.func @transform_6(%arg0: i32, %arg1: i32) -> (i32, i32) {
    %c0_i32 = arith.constant 0 : i32
    %c0_i32_0 = arith.constant 0 : i32
    return %arg0, %c0_i32 : i32, i32
  }
}

</mosaic_0001>

<llo_original>
// kernel: tpu_custom_call.1
$region0: #{tpu_custom_call.1}
  #allocation0 [shape = 'u32[]', space=smem, size = 0x4, offset = 0x4, fixed_abs, tag = 'smem constant byte address 0x4 - core index']
  #allocation1 [shape = 'u32[72,128]{1,0:T(1,128)}', space=vmem, size = 0x9000, scoped, tag = 'internal scratch']
  #allocation2 [shape = 'f32[16,32]{1,0:T(8,128)}', space=vmem, size = 0x2000, scoped, tag = 'scratch operand']
  %s0 = inlined_call_operand.vmem [shape: f32[16,128], index: 0, kind: input, shape index: {}]
  %s1 = inlined_call_operand.vmem [shape: f32[128,32], index: 1, kind: input, shape index: {}]
  %s2 = inlined_call_operand.vmem [shape: f32[16,32], index: 2, kind: input, shape index: {}]
  %s3 = inlined_call_operand.vmem [shape: f32[1,32], index: 3, kind: input, shape index: {}]
  %s4 = inlined_call_operand.vmem [shape: f32[32,128], index: 4, kind: input, shape index: {}]
  %s5 = inlined_call_operand.vmem [shape: f32[1,128], index: 5, kind: input, shape index: {}]
  %s6 = inlined_call_operand.hbm [shape: f32[16,128], index: 6, kind: output, shape index: {}]
  %s7 = sld [smem:[#allocation0]]
  $region46: #{tpu_custom_call.1} parent=0
    _
  %s9 = ssub.s32 1, %s7
  %s10 = scalar_select 0, %s9, %s7
  $region1: #{tpu_custom_call.1} parent=0
    #allocation3 [shape = 'u8[8192]{0}', space=vmem, size = 0x2000, scoped, tag = 'output window, operand 0, single buffered']
    #allocation4 [shape = 's32[1]{0}', space=sflag, size = 0x4, scoped, tag = 'scoped memory for tpu_custom_call.1']
    %11 = vsyncpa [#allocation4], 0
    // Predicated region
    $region2: #{tpu_custom_call.1} parent=1 // pred_check
      _
    $region3: #{tpu_custom_call.1} parent=1 // pred_check_branch
      %13 = sbr.rel (0) target = $region5
    $region4: #{tpu_custom_call.1} parent=1 // pred_region
      _
    $region5: #{tpu_custom_call.1} parent=1 // pred_fallthru
      _
    // Predicated region
    $region6: #{tpu_custom_call.1} parent=1 // pred_check
      _
    $region7: #{tpu_custom_call.1} parent=1 // pred_check_branch
      %15 = sbr.rel (0) target = $region9
    $region8: #{tpu_custom_call.1} parent=1 // pred_region
      _
    $region9: #{tpu_custom_call.1} parent=1 // pred_fallthru
      _
    // Predicated region
    $region10: #{tpu_custom_call.1} parent=1 // pred_check
      _
    $region11: #{tpu_custom_call.1} parent=1 // pred_check_branch
      %17 = sbr.rel (0) target = $region13
    $region12: #{tpu_custom_call.1} parent=1 // pred_region
      _
    $region13: #{tpu_custom_call.1} parent=1 // pred_fallthru
      _
    // Predicated region
    $region14: #{tpu_custom_call.1} parent=1 // pred_check
      _
    $region15: #{tpu_custom_call.1} parent=1 // pred_check_branch
      %19 = sbr.rel (0) target = $region17
    $region16: #{tpu_custom_call.1} parent=1 // pred_region
      _
    $region17: #{tpu_custom_call.1} parent=1 // pred_fallthru
      _
    // Predicated region
    $region18: #{tpu_custom_call.1} parent=1 // pred_check
      _
    $region19: #{tpu_custom_call.1} parent=1 // pred_check_branch
      %21 = sbr.rel (0) target = $region21
    $region20: #{tpu_custom_call.1} parent=1 // pred_region
      _
    $region21: #{tpu_custom_call.1} parent=1 // pred_fallthru
      _
    // Predicated region
    $region22: #{tpu_custom_call.1} parent=1 // pred_check
      _
    $region23: #{tpu_custom_call.1} parent=1 // pred_check_branch
      %23 = sbr.rel (0) target = $region25
    $region24: #{tpu_custom_call.1} parent=1 // pred_region
      _
    $region25: #{tpu_custom_call.1} parent=1 // pred_fallthru
      _
    %s24 = smul.u32 0, 128
    %s25 = scalar_lea.vmem %s1, %s24
    %v26 = vld [vmem:[%s25] sm:$0xff]
    %v27 = vld [vmem:[%s25 + $0x8] sm:$0xff]
    %v28 = vld [vmem:[%s25 + $0x10] sm:$0xff]
    %v29 = vld [vmem:[%s25 + $0x18] sm:$0xff]
    %v30 = vld [vmem:[%s25 + $0x20] sm:$0xff]
    %v31 = vld [vmem:[%s25 + $0x28] sm:$0xff]
    %v32 = vld [vmem:[%s25 + $0x30] sm:$0xff]
    %v33 = vld [vmem:[%s25 + $0x38] sm:$0xff]
    %v34 = vld [vmem:[%s25 + $0x40] sm:$0xff]
    %v35 = vld [vmem:[%s25 + $0x48] sm:$0xff]
    %v36 = vld [vmem:[%s25 + $0x50] sm:$0xff]
    %v37 = vld [vmem:[%s25 + $0x58] sm:$0xff]
    %v38 = vld [vmem:[%s25 + $0x60] sm:$0xff]
    %v39 = vld [vmem:[%s25 + $0x68] sm:$0xff]
    %v40 = vld [vmem:[%s25 + $0x70] sm:$0xff]
    %v41 = vld [vmem:[%s25 + $0x78] sm:$0xff]
    %v42 = vld [vmem:[%s0] sm:$0xff]
    %v43 = vld [vmem:[%s0 + $0x8] sm:$0xff]
    %44 = vmatpush.msra.mxu0 %v41
    %45 = vmatpush.msra.mxu0 %v40
    %46 = vmatpush.msra.mxu0 %v39
    %47 = vmatpush.msra.mxu0 %v38
    %48 = vmatpush.msra.mxu0 %v37
    %49 = vmatpush.msra.mxu0 %v36
    %50 = vmatpush.msra.mxu0 %v35
    %51 = vmatpush.msra.mxu0 %v34
    %52 = vmatpush.msra.mxu0 %v33
    %53 = vmatpush.msra.mxu0 %v32
    %54 = vmatpush.msra.mxu0 %v31
    %55 = vmatpush.msra.mxu0 %v30
    %56 = vmatpush.msra.mxu0 %v29
    %57 = vmatpush.msra.mxu0 %v28
    %58 = vmatpush.msra.mxu0 %v27
    %59 = vmatpush.msra.mxu0 %v26
    %60 = vmatmul.f32.gmra.mxu0 %v42
    %v61 = vpop.f32.mrf.mxu0
    %v62 = vadd.f32 0.0, %v61
    %63 = vmatmul.f32.gmra.mxu0 %v43
    %v64 = vpop.f32.mrf.mxu0
    %v65 = vadd.f32 0.0, %v64
    %66 = vdwg.mxu0
    %p67 = scmp.eq.s32.totalorder 0, 0
    // Predicated region
    $region26: #{tpu_custom_call.1} parent=1 // pred_check
      %p68 = pneg %p67
    $region27: #{tpu_custom_call.1} parent=1 // pred_check_branch
      %70 = sbr.rel (%p68) target = $region29
    $region28: #{tpu_custom_call.1} parent=1 // pred_region
      %vm71 = vcmask 261120
      %72 = vst.msk [vmem:[#allocation2] sm:$0xff] %vm71, %v62
      %73 = vst.msk [vmem:[#allocation2 + $0x8] sm:$0xff] %vm71, %v65
    $region29: #{tpu_custom_call.1} parent=1 // pred_fallthru
      _
    %p74 = scmp.ne.s32.totalorder 0, 0
    // Predicated region
    $region30: #{tpu_custom_call.1} parent=1 // pred_check
      %p75 = pneg %p74
    $region31: #{tpu_custom_call.1} parent=1 // pred_check_branch
      %77 = sbr.rel (%p75) target = $region33
    $region32: #{tpu_custom_call.1} parent=1 // pred_region
      %v78 = vld [vmem:[#allocation2] sm:$0xff]
      %v79 = vld [vmem:[#allocation2 + $0x8] sm:$0xff]
      %v80 = vadd.f32 %v78, %v62
      %v81 = vadd.f32 %v79, %v65
      %vm82 = vcmask 261120
      %83 = vst.msk [vmem:[#allocation2] sm:$0xff] %vm82, %v80
      %84 = vst.msk [vmem:[#allocation2 + $0x8] sm:$0xff] %vm82, %v81
    $region33: #{tpu_custom_call.1} parent=1 // pred_fallthru
      _
    // Predicated region
    $region34: #{tpu_custom_call.1} parent=1 // pred_check
      %p85 = pneg %p67
    $region35: #{tpu_custom_call.1} parent=1 // pred_check_branch
      %87 = sbr.rel (%p85) target = $region37
    $region36: #{tpu_custom_call.1} parent=1 // pred_region
      %v88 = vld [vmem:[%s3] sm:$0x1]
      %v89 = vadd.f32 %v88, 1.0
      %v90 = vld [vmem:[#allocation2] sm:$0xff]
      %v91 = vld [vmem:[#allocation2 + $0x8] sm:$0xff]
      %v93 = vperm.slane %v89, 0
      %v95 = vmul.f32 %v90, %v93
      %v96 = vmul.f32 %v91, %v93
      %v97 = vld [vmem:[%s2] sm:$0xff]
      %v98 = vld [vmem:[%s2 + $0x8] sm:$0xff]
      %v99 = vsub.f32 %v97, %v95
      %v100 = vsub.f32 %v98, %v96
      %v101 = vld [vmem:[%s4] sm:$0xff]
      %v102 = vld [vmem:[%s4 + $0x8] sm:$0xff]
      %v103 = vld [vmem:[%s4 + $0x10] sm:$0xff]
      %v104 = vld [vmem:[%s4 + $0x18] sm:$0xff]
      %v105 = vld [vmem:[%s5] sm:$0x1]
      %v107 = vperm.slane %v105, 0
      %vm109 = vcmask 261120
      %v111 = vsel %vm109, %v99, 0
      %v114 = vsel %vm109, %v100, 0
      %116 = vmatpush.msra.mxu0 0.0
      %117 = vmatpush.msra.mxu0 0.0
      %118 = vmatpush.msra.mxu0 0.0
      %119 = vmatpush.msra.mxu0 0.0
      %120 = vmatpush.msra.mxu0 0.0
      %121 = vmatpush.msra.mxu0 0.0
      %122 = vmatpush.msra.mxu0 0.0
      %123 = vmatpush.msra.mxu0 0.0
      %124 = vmatpush.msra.mxu0 0.0
      %125 = vmatpush.msra.mxu0 0.0
      %126 = vmatpush.msra.mxu0 0.0
      %127 = vmatpush.msra.mxu0 0.0
      %128 = vmatpush.msra.mxu0 %v104
      %129 = vmatpush.msra.mxu0 %v103
      %130 = vmatpush.msra.mxu0 %v102
      %131 = vmatpush.msra.mxu0 %v101
      %132 = vmatmul.f32.gmra.mxu0 %v111
      %v133 = vpop.f32.mrf.mxu0
      %v134 = vadd.f32 %v107, %v133
      %135 = vmatmul.f32.gmra.mxu0 %v114
      %v136 = vpop.f32.mrf.mxu0
      %v137 = vadd.f32 %v107, %v136
      %138 = vdwg.mxu0
      %139 = vst [vmem:[#allocation3] sm:$0xff] %v134
      %140 = vst [vmem:[#allocation3 + $0x8] sm:$0xff] %v137
    $region37: #{tpu_custom_call.1} parent=1 // pred_fallthru
      _
    // Predicated region
    $region38: #{tpu_custom_call.1} parent=1 // pred_check
      _
    $region39: #{tpu_custom_call.1} parent=1 // pred_check_branch
      %142 = sbr.rel (0) target = $region41
    $region40: #{tpu_custom_call.1} parent=1 // pred_region
      %144 = vsyncadd [#allocation4], 0
      %s145 = sshll.u32 [#allocation3], 4
      %s146 = int_to_ptr.vmem [resolvable:$true] %s145
      %s147 = sshll.u32 %s6, 4
      %s148 = int_to_ptr.hbm [resolvable:$true] %s147
      %153 = dma.vmem_to_hbm [thread:$0]  %s146, 256, %s148, [#allocation4], 128, 128, 8
    $region41: #{tpu_custom_call.1} parent=1 // pred_fallthru
      _
    // Predicated region
    $region42: #{tpu_custom_call.1} parent=1 // pred_check
      _
    $region43: #{tpu_custom_call.1} parent=1 // pred_check_branch
      %155 = sbr.rel (0) target = $region45
    $region44: #{tpu_custom_call.1} parent=1 // pred_region
      %157 = dma.done [#allocation4], 256
    $region45: #{tpu_custom_call.1} parent=1 // pred_fallthru
      _
    %158 = vsyncpa [#allocation4], 1

</llo_original>
